<compile_context>
chip_gen: v7x
topology: tpu7x:2x2x1
jax: 0.10.0
libtpu: 0.0.40
codegen_flags: <defaults>
</compile_context>

<pallas_src>
import functools

import jax
import jax.numpy as jnp
import numpy as np
from jax.experimental import pallas as pl
from jax.experimental.pallas import tpu as pltpu


def _round_up(v, m):
    return ((v + m - 1) // m) * m


def _conv_rowtile_kernel(x_ref, w_ref, b_ref, o_ref, *, k, Wp, tm):
    """One (image n, O-tile j, row-tile t) grid step.

    x_ref: (P, k*C)     kw-folded, spatially-flattened padded image (whole
                        image, VMEM-resident; its block index depends only on
                        n, so it is DMA'd once per image).
    w_ref: (k, k*C, To) weights for this O-tile (resident across n, t).
    b_ref: (1, To)      bias for this O-tile.
    o_ref: (tm, To)     output rows [t*tm, t*tm + tm) of the uncropped row grid.
    """
    t = pl.program_id(2)
    row0 = pl.multiple_of(t * tm, 8)       # tm is forced to a multiple of 8

    # Bias folded into the register accumulator init: no VMEM scratch, no
    # per-tap read-modify-write passes over the accumulator.
    acc = jnp.broadcast_to(b_ref[...].astype(jnp.float32), o_ref.shape)

    # kh-fold: k register-accumulated MXU dots with contraction depth k*C.
    # Each LHS is a plain dynamic sublane slice of the resident image — no
    # strided-window reshape / relayout per tap.
    for kh in range(k):
        lhs = x_ref[pl.ds(row0 + kh * Wp, tm), :]
        acc = acc + jnp.dot(lhs, w_ref[kh], preferred_element_type=jnp.float32)

    o_ref[...] = acc.astype(o_ref.dtype)


def my_convo2d(x, weight, bias=None):
    """Equivalent of MyConvo2d.forward: Conv2d(stride=1, padding=(k-1)//2) + bias.

    x: (N, C, H, W)   weight: (O, C, k, k)   bias: (O,) or None
    Returns (N, O, Ho, Wo) with Ho = H + 2*pad - k + 1 (== H for odd k).
    """
    N, C, H, W = x.shape
    O, Cw, kh_, kw_ = weight.shape
    assert Cw == C and kh_ == kw_, "square kernel and matching channels expected"
    k = kh_
    pad = (k - 1) // 2                      # MyConvo2d padding rule
    Hp, Wp = H + 2 * pad, W + 2 * pad
    Ho, Wo = Hp - k + 1, Wp - k + 1         # stride-1 output size

    LANE = 128
    Op = _round_up(O, LANE)                 # lane-dense output channels
    To = LANE
    kC = k * C                              # per-dot contraction depth

    # Uncropped output row grid: m = h*Wp + w, h in [0,Ho), w in [0,Wp).
    # Columns w >= Wo are computed-and-discarded ((k-1)/Wp ~ 11% waste here);
    # in exchange every conv tap is a constant row shift of the flat image.
    M = Ho * Wp

    # Row tile: multiple of 8 sublanes, sized so there are several parallel
    # grid steps (pipelining + both v7x TensorCores) with bounded per-step
    # VMEM. Demo shape: tm=72, 4 row tiles/image, 8 grid steps total.
    tm = min(256, max(8, -(-M // 4)))
    tm = _round_up(tm, 8)
    Mp = _round_up(M, tm)
    T = Mp // tm
    P = Mp + (k - 1) * Wp                   # image rows the kernel indexes

    # --- wrapper-side layout prep (single XLA pass each) ---------------------
    # NCHW -> NHWC, zero-pad spatially, flatten spatial to rows: (N, Hp*Wp, C).
    xp = jnp.pad(jnp.transpose(x, (0, 2, 3, 1)),
                 ((0, 0), (pad, pad), (pad, pad), (0, 0)))
    xf = xp.reshape(N, Hp * Wp, C)
    # Zero rows so every kernel slice is in range (padded row tiles + kw shift).
    xf = jnp.pad(xf, ((0, 0), (0, P + k - 1 - Hp * Wp), (0, 0)))
    # kw-fold: xkw[n, p, kw*C + c] = xf[n, p + kw, c]. One k-wide lane concat
    # in XLA (k x duplication of a small tensor) buys a k*C contraction depth
    # and removes all in-kernel lane-axis shuffling.
    xkw = jnp.concatenate([xf[:, kw:kw + P, :] for kw in range(k)], axis=-1)

    # OIHW -> (k, k*C, Op): contraction index kw*C + c, matching xkw's lanes.
    w2 = jnp.transpose(weight, (2, 3, 1, 0)).reshape(k, kC, O)
    if Op != O:
        w2 = jnp.pad(w2, ((0, 0), (0, 0), (0, Op - O)))
    b = jnp.zeros((O,), jnp.float32) if bias is None else bias.astype(jnp.float32)
    b2 = jnp.pad(b, (0, Op - O)).reshape(1, Op)

    # Per-step VMEM: image block (P, kC) + (k, kC, To) weights + (tm, To) out,
    # all double-buffered: well under 1 MiB at the demo shape, bounded by tm
    # for larger ones.
    # TODO(synk): for very large images (P * kC * 4B beyond the VMEM budget),
    # switch the image input to memory_space=pl.ANY and manually DMA a
    # (tm + (k-1)*Wp, k*C) halo'd row window per step instead of keeping the
    # whole kw-folded image resident per image. On v6e/v7x, casting xkw/w2 to
    # bf16 (keeping the f32 accumulator) is a further win for large C; kept
    # f32 here for the exact numerical check.
    kernel = functools.partial(_conv_rowtile_kernel, k=k, Wp=Wp, tm=tm)
    out = pl.pallas_call(
        kernel,
        out_shape=jax.ShapeDtypeStruct((N, Mp, Op), x.dtype),
        grid_spec=pltpu.PrefetchScalarGridSpec(
            num_scalar_prefetch=0,
            grid=(N, Op // To, T),          # image outermost: DMA'd once per n
            in_specs=[
                pl.BlockSpec((None, P, kC), lambda n, j, t: (n, 0, 0)),   # image
                pl.BlockSpec((k, kC, To), lambda n, j, t: (0, 0, j)),     # weights
                pl.BlockSpec((1, To), lambda n, j, t: (0, j)),            # bias
            ],
            out_specs=pl.BlockSpec((None, tm, To), lambda n, j, t: (n, t, j)),
        ),
        compiler_params=pltpu.CompilerParams(
            dimension_semantics=("parallel", "parallel", "parallel"),
            vmem_limit_bytes=32 * 1024 * 1024,   # explicit, sized for v7x
        ),
    )(xkw, w2, b2)

    # Drop padded rows / uncropped columns / padded channels; NHWC -> NCHW.
    out = out[:, :M, :O].reshape(N, Ho, Wp, O)[:, :, :Wo, :]
    return jnp.transpose(out, (0, 3, 1, 2))


if __name__ == "__main__":
    # MyConvo2d(input_dim=4, output_dim=8, kernel_size=3, stride=1, bias=True)
    N, C, H, W = 2, 4, 16, 16
    O, k = 8, 3

    key = jax.random.PRNGKey(0)
    kx, kw, kb = jax.random.split(key, 3)

    x = jax.random.normal(kx, (N, C, H, W), dtype=jnp.float32)

    # Deterministic init mimicking nn.Conv2d default (uniform in +-1/sqrt(fan_in)).
    fan_in = C * k * k
    bound = 1.0 / np.sqrt(fan_in)
    weight = jax.random.uniform(kw, (O, C, k, k), jnp.float32, -bound, bound)
    bias = jax.random.uniform(kb, (O,), jnp.float32, -bound, bound)

    conv = jax.jit(my_convo2d)
    out = jax.block_until_ready(conv(x, weight, bias))

    # Cross-check against XLA's conv (explicit PyTorch-style padding).
    pad = (k - 1) // 2
    ref = jax.lax.conv_general_dilated(
        x, weight, window_strides=(1, 1),
        padding=((pad, pad), (pad, pad)),
        dimension_numbers=("NCHW", "OIHW", "NCHW")) + bias[None, :, None, None]
    ref = jax.block_until_ready(ref)

    assert out.shape == ref.shape, (out.shape, ref.shape)
    np.testing.assert_allclose(np.asarray(out), np.asarray(ref), atol=1e-4, rtol=1e-4)
    print("KERNEL_OK")
</pallas_src>

<mosaic_0001>
module attributes {stable_mosaic.version = 11 : i64} {
  func.func @_conv_rowtile_kernel(%arg0: i32, %arg1: i32, %arg2: i32, %arg3: memref<1x324x12xf32, #tpu.memory_space<vmem>>, %arg4: memref<3x12x128xf32, #tpu.memory_space<vmem>>, %arg5: memref<1x128xf32, #tpu.memory_space<vmem>>, %arg6: memref<1x72x128xf32, #tpu.memory_space<vmem>>) attributes {dimension_semantics = [#tpu.dimension_semantics<parallel>, #tpu.dimension_semantics<parallel>, #tpu.dimension_semantics<parallel>], iteration_bounds = array<i64: 2, 1, 4>, scalar_prefetch = 0 : i64, scratch_operands = 0 : i64, tpu.core_type = #tpu.core_type<tc>, window_params = [{transform_indices = @transform_0, window_bounds = array<i64: 1, 324, 12>}, {transform_indices = @transform_1, window_bounds = array<i64: 3, 12, 128>}, {transform_indices = @transform_2, window_bounds = array<i64: 1, 128>}, {transform_indices = @transform_3, window_bounds = array<i64: 1, 72, 128>}]} {
    %c72_i32 = arith.constant 72 : i32
    %0 = arith.muli %arg2, %c72_i32 : i32
    %1 = tpu.assume_multiple %0, 8 : i32
    %c0 = arith.constant 0 : index
    %c0_0 = arith.constant 0 : index
    %2 = vector.load %arg5[%c0, %c0_0] : memref<1x128xf32, #tpu.memory_space<vmem>>, vector<1x128xf32>
    %3 = vector.shape_cast %2 : vector<1x128xf32> to vector<1x128xf32>
    %4 = vector.broadcast %3 : vector<1x128xf32> to vector<72x128xf32>
    %c0_i32 = arith.constant 0 : i32
    %5 = arith.addi %1, %c0_i32 : i32
    %c0_1 = arith.constant 0 : index
    %6 = arith.index_cast %5 : i32 to index
    %c0_2 = arith.constant 0 : index
    %7 = vector.load %arg3[%c0_1, %6, %c0_2] : memref<1x324x12xf32, #tpu.memory_space<vmem>>, vector<1x72x12xf32>
    %8 = vector.shape_cast %7 : vector<1x72x12xf32> to vector<72x12xf32>
    %c0_3 = arith.constant 0 : index
    %c0_4 = arith.constant 0 : index
    %c0_5 = arith.constant 0 : index
    %9 = vector.load %arg4[%c0_3, %c0_4, %c0_5] : memref<3x12x128xf32, #tpu.memory_space<vmem>>, vector<1x12x128xf32>
    %10 = vector.shape_cast %9 : vector<1x12x128xf32> to vector<12x128xf32>
    %cst = arith.constant dense<0.000000e+00> : vector<72x128xf32>
    %11 = tpu.matmul %8, %10, %cst {dimension_numbers = #tpu.dot_dimension_numbers<[1], [0], [0], [1], [0, 0, 1, 1], [], []>} : vector<72x12xf32>, vector<12x128xf32>, vector<72x128xf32> -> vector<72x128xf32>
    %12 = arith.addf %4, %11 : vector<72x128xf32>
    %c18_i32 = arith.constant 18 : i32
    %13 = arith.addi %1, %c18_i32 : i32
    %c0_6 = arith.constant 0 : index
    %14 = arith.index_cast %13 : i32 to index
    %c0_7 = arith.constant 0 : index
    %15 = vector.load %arg3[%c0_6, %14, %c0_7] : memref<1x324x12xf32, #tpu.memory_space<vmem>>, vector<1x72x12xf32>
    %16 = vector.shape_cast %15 : vector<1x72x12xf32> to vector<72x12xf32>
    %c1 = arith.constant 1 : index
    %c0_8 = arith.constant 0 : index
    %c0_9 = arith.constant 0 : index
    %17 = vector.load %arg4[%c1, %c0_8, %c0_9] : memref<3x12x128xf32, #tpu.memory_space<vmem>>, vector<1x12x128xf32>
    %18 = vector.shape_cast %17 : vector<1x12x128xf32> to vector<12x128xf32>
    %cst_10 = arith.constant dense<0.000000e+00> : vector<72x128xf32>
    %19 = tpu.matmul %16, %18, %cst_10 {dimension_numbers = #tpu.dot_dimension_numbers<[1], [0], [0], [1], [0, 0, 1, 1], [], []>} : vector<72x12xf32>, vector<12x128xf32>, vector<72x128xf32> -> vector<72x128xf32>
    %20 = arith.addf %12, %19 : vector<72x128xf32>
    %c36_i32 = arith.constant 36 : i32
    %21 = arith.addi %1, %c36_i32 : i32
    %c0_11 = arith.constant 0 : index
    %22 = arith.index_cast %21 : i32 to index
    %c0_12 = arith.constant 0 : index
    %23 = vector.load %arg3[%c0_11, %22, %c0_12] : memref<1x324x12xf32, #tpu.memory_space<vmem>>, vector<1x72x12xf32>
    %24 = vector.shape_cast %23 : vector<1x72x12xf32> to vector<72x12xf32>
    %c2 = arith.constant 2 : index
    %c0_13 = arith.constant 0 : index
    %c0_14 = arith.constant 0 : index
    %25 = vector.load %arg4[%c2, %c0_13, %c0_14] : memref<3x12x128xf32, #tpu.memory_space<vmem>>, vector<1x12x128xf32>
    %26 = vector.shape_cast %25 : vector<1x12x128xf32> to vector<12x128xf32>
    %cst_15 = arith.constant dense<0.000000e+00> : vector<72x128xf32>
    %27 = tpu.matmul %24, %26, %cst_15 {dimension_numbers = #tpu.dot_dimension_numbers<[1], [0], [0], [1], [0, 0, 1, 1], [], []>} : vector<72x12xf32>, vector<12x128xf32>, vector<72x128xf32> -> vector<72x128xf32>
    %28 = arith.addf %20, %27 : vector<72x128xf32>
    %c0_16 = arith.constant 0 : index
    %c0_17 = arith.constant 0 : index
    %c0_18 = arith.constant 0 : index
    %29 = vector.load %arg6[%c0_16, %c0_17, %c0_18] : memref<1x72x128xf32, #tpu.memory_space<vmem>>, vector<1x72x128xf32>
    %30 = vector.shape_cast %29 : vector<1x72x128xf32> to vector<72x128xf32>
    %31 = vector.shape_cast %28 : vector<72x128xf32> to vector<1x72x128xf32>
    tpu.vector_store %arg6[%c0_16, %c0_17, %c0_18], %31 {strides = array<i32>} : memref<1x72x128xf32, #tpu.memory_space<vmem>>, vector<1x72x128xf32>,
    return
  }
  func.func @transform_0(%arg0: i32, %arg1: i32, %arg2: i32) -> (i32, i32, i32) {
    %c0_i32 = arith.constant 0 : i32
    %c0_i32_0 = arith.constant 0 : i32
    %c0_i32_1 = arith.constant 0 : i32
    return %arg0, %c0_i32, %c0_i32_0 : i32, i32, i32
  }
  func.func @transform_1(%arg0: i32, %arg1: i32, %arg2: i32) -> (i32, i32, i32) {
    %c0_i32 = arith.constant 0 : i32
    %c0_i32_0 = arith.constant 0 : i32
    %c0_i32_1 = arith.constant 0 : i32
    return %c0_i32, %c0_i32_0, %arg1 : i32, i32, i32
  }
  func.func @transform_2(%arg0: i32, %arg1: i32, %arg2: i32) -> (i32, i32) {
    %c0_i32 = arith.constant 0 : i32
    %c0_i32_0 = arith.constant 0 : i32
    return %c0_i32, %arg1 : i32, i32
  }
  func.func @transform_3(%arg0: i32, %arg1: i32, %arg2: i32) -> (i32, i32, i32) {
    %c0_i32 = arith.constant 0 : i32
    return %arg0, %arg2, %arg1 : i32, i32, i32
  }
}

</mosaic_0001>

<llo_original>
// kernel: my_convo2d.1
$region0: #{my_convo2d.1}
  #allocation0 [shape = 'u32[]', space=smem, size = 0x4, offset = 0x4, fixed_abs, tag = 'smem constant byte address 0x4 - core index']
  #allocation1 [shape = 'u32[144,128]{1,0:T(1,128)}', space=vmem, size = 0x12000, scoped, tag = 'internal scratch']
  %s0 = inlined_call_operand.vmem [shape: f32[2,324,12], index: 0, kind: input, shape index: {}]
  %s1 = inlined_call_operand.vmem [shape: f32[3,12,128], index: 1, kind: input, shape index: {}]
  %s2 = inlined_call_operand.vmem [shape: f32[1,128], index: 2, kind: input, shape index: {}]
  %s3 = inlined_call_operand.vmem [shape: f32[2,288,128], index: 3, kind: output, shape index: {}]
  %s4 = sld [smem:[#allocation0]]
  $region45: #{my_convo2d.1} parent=0
    _
  %s6 = ssub.s32 1, %s4
  %s7 = scalar_select 0, %s6, %s4
  loop: start=0, step=1, limit=10
  $region2: #{my_convo2d.1} parent=0 // loop_pre_header
    _
  $region3: #{my_convo2d.1} parent=0 // loop_header
    %s9 = sphi 0, %s13
    %p10 = scmp.ge.s32.totalorder %s9, 10
    %s16 = sphi 0, %s35
    %s17 = sphi 0, %s31
    %s18 = sphi 0, %s27
    %s19 = sphi 0, %s16
    %s20 = sphi 0, %s17
    %s21 = sphi 0, %s18
    %s22 = sphi 0, %s19
    %s23 = sphi 0, %s20
    %s24 = sphi 0, %s21
    %s38 = sphi 0, %s40
    %s41 = sphi 0, %s38
    %s42 = sphi 0, %s41
    %s58 = sphi 0, %s42
    %s64 = sphi 0, %s66
    %s67 = sphi 0, %s64
    %s68 = sphi 0, %s67
    %s84 = sphi 0, %s68
    %s90 = sphi 0, %s92
    %s93 = sphi 0, %s90
    %s94 = sphi 0, %s93
    %s110 = sphi 0, %s94
    %s120 = sphi 0, %s122
    %s123 = sphi 0, %s120
    %s124 = sphi 0, %s123
    %s140 = sphi 0, %s124
  $region4: #{my_convo2d.1} parent=0 // loop_header_branch
    %12 = sbr.rel (%p10) target = $region8
  $region5: #{my_convo2d.1} parent=0 // loop_body
    %s14 = ssub.s32 %s9, 1
    %s15 = ssub.s32 %s9, 2
    %s25 = sadd.s32 1, %s18
    %p26 = scmp.ge.s32.totalorder %s25, 4
    %s27 = scalar_select %p26, 0, %s25
    %s28 = sadd.s32 1, %s17
    %s29 = scalar_select %p26, %s28, %s17
    %p30 = scmp.ge.s32.totalorder %s29, 1
    %s31 = scalar_select %p30, 0, %s29
    %s32 = sadd.s32 1, %s16
    %s33 = scalar_select %p30, %s32, %s16
    %p34 = scmp.ge.s32.totalorder %s33, 2
    %s35 = scalar_select %p34, 0, %s33
    %s36 = ssub.s32 %s16, %s35
    %p37 = scmp.eq.s32.totalorder %s36, 0
    %s39 = sadd.s32 %s38, 1
    %s40 = scalar_select %p37, %s38, %s39
    %p43 = pneg %p37
    %p44 = scmp.eq.s32.totalorder %s9, 7
    %p45 = por %p43, %p44
    %p46 = scmp.ne.s32.totalorder %s38, %s41
    %p47 = scmp.eq.s32.totalorder %s9, 0
    %p48 = por %p46, %p47
    %p49 = scmp.ne.s32.totalorder %s38, %s41
    %p50 = scmp.eq.s32.totalorder %s14, 7
    %p51 = por %p49, %p50
    %p52 = scmp.ne.s32.totalorder %s41, %s42
    %p53 = scmp.eq.s32.totalorder %s14, 0
    %p54 = por %p52, %p53
    %p55 = scmp.ne.s32.totalorder %s41, %s42
    %p56 = scmp.eq.s32.totalorder %s15, 7
    %p57 = por %p55, %p56
    %p59 = scmp.ne.s32.totalorder %s42, %s58
    %p60 = scmp.eq.s32.totalorder %s15, 0
    %p61 = por %p59, %p60
    %s62 = ssub.s32 %s17, %s31
    %p63 = scmp.eq.s32.totalorder %s62, 0
    %s65 = sadd.s32 %s64, 1
    %s66 = scalar_select %p63, %s64, %s65
    %p69 = pneg %p63
    %p70 = scmp.eq.s32.totalorder %s9, 7
    %p71 = por %p69, %p70
    %p72 = scmp.ne.s32.totalorder %s64, %s67
    %p73 = scmp.eq.s32.totalorder %s9, 0
    %p74 = por %p72, %p73
    %p75 = scmp.ne.s32.totalorder %s64, %s67
    %p76 = scmp.eq.s32.totalorder %s14, 7
    %p77 = por %p75, %p76
    %p78 = scmp.ne.s32.totalorder %s67, %s68
    %p79 = scmp.eq.s32.totalorder %s14, 0
    %p80 = por %p78, %p79
    %p81 = scmp.ne.s32.totalorder %s67, %s68
    %p82 = scmp.eq.s32.totalorder %s15, 7
    %p83 = por %p81, %p82
    %p85 = scmp.ne.s32.totalorder %s68, %s84
    %p86 = scmp.eq.s32.totalorder %s15, 0
    %p87 = por %p85, %p86
    %s88 = ssub.s32 %s17, %s31
    %p89 = scmp.eq.s32.totalorder %s88, 0
    %s91 = sadd.s32 %s90, 1
    %s92 = scalar_select %p89, %s90, %s91
    %p95 = pneg %p89
    %p96 = scmp.eq.s32.totalorder %s9, 7
    %p97 = por %p95, %p96
    %p98 = scmp.ne.s32.totalorder %s90, %s93
    %p99 = scmp.eq.s32.totalorder %s9, 0
    %p100 = por %p98, %p99
    %p101 = scmp.ne.s32.totalorder %s90, %s93
    %p102 = scmp.eq.s32.totalorder %s14, 7
    %p103 = por %p101, %p102
    %p104 = scmp.ne.s32.totalorder %s93, %s94
    %p105 = scmp.eq.s32.totalorder %s14, 0
    %p106 = por %p104, %p105
    %p107 = scmp.ne.s32.totalorder %s93, %s94
    %p108 = scmp.eq.s32.totalorder %s15, 7
    %p109 = por %p107, %p108
    %p111 = scmp.ne.s32.totalorder %s94, %s110
    %p112 = scmp.eq.s32.totalorder %s15, 0
    %p113 = por %p111, %p112
    %s114 = ssub.s32 %s16, %s35
    %s115 = ssub.s32 %s18, %s27
    %s116 = sor.u32 %s114, %s115
    %s117 = ssub.s32 %s17, %s31
    %s118 = sor.u32 %s116, %s117
    %p119 = scmp.eq.s32.totalorder %s118, 0
    %s121 = sadd.s32 %s120, 1
    %s122 = scalar_select %p119, %s120, %s121
    %p125 = pneg %p119
    %p126 = scmp.eq.s32.totalorder %s9, 7
    %p127 = por %p125, %p126
    %p128 = scmp.ne.s32.totalorder %s120, %s123
    %p129 = scmp.eq.s32.totalorder %s9, 0
    %p130 = por %p128, %p129
    %p131 = scmp.ne.s32.totalorder %s120, %s123
    %p132 = scmp.eq.s32.totalorder %s14, 7
    %p133 = por %p131, %p132
    %p134 = scmp.ne.s32.totalorder %s123, %s124
    %p135 = scmp.eq.s32.totalorder %s14, 0
    %p136 = por %p134, %p135
    %p137 = scmp.ne.s32.totalorder %s123, %s124
    %p138 = scmp.eq.s32.totalorder %s15, 7
    %p139 = por %p137, %p138
    %p141 = scmp.ne.s32.totalorder %s124, %s140
    %p142 = scmp.eq.s32.totalorder %s15, 0
    %p143 = por %p141, %p142
    %p144 = scmp.le.s32.totalorder 1, %s9
    %p145 = scmp.lt.s32.totalorder %s9, 9
    %p146 = pnand %p144, %p145
    %p147 = pneg %p146
    // Predicated region
    $region9: #{my_convo2d.1} parent=5 // pred_check
      _
    $region10: #{my_convo2d.1} parent=5 // pred_check_branch
      %149 = sbr.rel (%p146) target = $region12
    $region11: #{my_convo2d.1} parent=5 // pred_region
      %s150 = ssub.s32 %s9, 1
      // Predicated region
      $region13: #{my_convo2d.1} parent=11 // pred_check
        %p151 = pneg %p80
      $region14: #{my_convo2d.1} parent=11 // pred_check_branch
        %153 = sbr.rel (%p151) target = $region16
      $region15: #{my_convo2d.1} parent=11 // pred_region
        %p154 = scmp.lt.s32.totalorder %s20, 0
        %s155 = scalar_select %p154, %s20, 0
        %s156 = smul.addr %s155, 8
        %s157 = scalar_lea.vmem %s1, %s156
      $region16: #{my_convo2d.1} parent=11 // pred_fallthru
        _
      // Predicated region
      $region17: #{my_convo2d.1} parent=11 // pred_check
        %p158 = pneg %p106
      $region18: #{my_convo2d.1} parent=11 // pred_check_branch
        %160 = sbr.rel (%p158) target = $region20
      $region19: #{my_convo2d.1} parent=11 // pred_region
        %p161 = scmp.lt.s32.totalorder %s20, 0
        %s162 = scalar_select %p161, %s20, 0
        %s163 = scalar_lea.vmem %s2, %s162
      $region20: #{my_convo2d.1} parent=11 // pred_fallthru
        _
    $region12: #{my_convo2d.1} parent=5 // pred_fallthru
      _
    %p164 = scmp.lt.s32.totalorder %s9, 8
    // Predicated region
    $region21: #{my_convo2d.1} parent=5 // pred_check
      %p165 = pneg %p164
    $region22: #{my_convo2d.1} parent=5 // pred_check_branch
      %167 = sbr.rel (%p165) target = $region24
    $region23: #{my_convo2d.1} parent=5 // pred_region
      // Predicated region
      $region25: #{my_convo2d.1} parent=23 // pred_check
        %p168 = pneg %p48
      $region26: #{my_convo2d.1} parent=23 // pred_check_branch
        %170 = sbr.rel (%p168) target = $region28
      $region27: #{my_convo2d.1} parent=23 // pred_region
        %p171 = scmp.lt.s32.totalorder %s16, 1
        %s172 = scalar_select %p171, %s16, 1
        %s173 = smul.addr %s172, 41
        %s174 = smul.addr %s173, 8
        %s175 = scalar_lea.vmem %s0, %s174
      $region28: #{my_convo2d.1} parent=23 // pred_fallthru
        _
    $region24: #{my_convo2d.1} parent=5 // pred_fallthru
      _
    %p176 = scmp.le.s32.totalorder 1, %s9
    %p177 = scmp.lt.s32.totalorder %s9, 9
    %p178 = pnand %p176, %p177
    %p179 = pneg %p178
    // Predicated region
    $region29: #{my_convo2d.1} parent=5 // pred_check
      _
    $region30: #{my_convo2d.1} parent=5 // pred_check_branch
      %181 = sbr.rel (%p178) target = $region32
    $region31: #{my_convo2d.1} parent=5 // pred_region
      %s182 = ssub.s32 %s9, 1
      %p183 = scmp.lt.s32.totalorder %s19, 1
      %s184 = scalar_select %p183, %s19, 1
      %s185 = smul.addr %s184, 41
      %s186 = smul.addr %s185, 8
      %s187 = scalar_lea.vmem %s0, %s186
      %p188 = pneg %p54
      %p189 = pneg %p51
      %p190 = scmp.lt.s32.totalorder %s20, 0
      %s191 = scalar_select %p190, %s20, 0
      %s192 = smul.addr %s191, 8
      %s193 = scalar_lea.vmem %s1, %s192
      %p194 = pneg %p80
      %p195 = pneg %p77
      %p196 = scmp.lt.s32.totalorder %s20, 0
      %s197 = scalar_select %p196, %s20, 0
      %s198 = scalar_lea.vmem %s2, %s197
      %p199 = pneg %p106
      %p200 = pneg %p103
      %p201 = pneg %p136
      %p202 = pneg %p133
      %s203 = smul.u32 9, %s21
      %p204 = scmp.lt.s32.totalorder %s19, 1
      %s205 = scalar_select %p204, %s19, 1
      %p206 = scmp.lt.s32.totalorder %s203, 35
      %s207 = scalar_select %p206, %s203, 35
      %p208 = scmp.lt.s32.totalorder %s20, 0
      %s209 = scalar_select %p208, %s20, 0
      %s210 = sadd.s32 %s209, %s207
      %s211 = smul.addr %s205, 36
      %s212 = sadd.s32 %s210, %s211
      %s213 = smul.addr %s212, 8
      %s214 = scalar_lea.vmem %s3, %s213
      %p215 = scmp.lt.s32.totalorder %s19, 1
      %s216 = scalar_select %p215, %s19, 1
      %s217 = smul.addr %s216, 41
      %s218 = smul.addr %s217, 8
      %s219 = scalar_lea.vmem %s0, %s218
      %p220 = scmp.lt.s32.totalorder %s20, 0
      %s221 = scalar_select %p220, %s20, 0
      %s222 = smul.addr %s221, 8
      %s223 = scalar_lea.vmem %s1, %s222
      %p224 = scmp.lt.s32.totalorder %s20, 0
      %s225 = scalar_select %p224, %s20, 0
      %s226 = scalar_lea.vmem %s2, %s225
      %s227 = smul.u32 9, %s21
      %p228 = scmp.lt.s32.totalorder %s19, 1
      %s229 = scalar_select %p228, %s19, 1
      %p230 = scmp.lt.s32.totalorder %s227, 35
      %s231 = scalar_select %p230, %s227, 35
      %p232 = scmp.lt.s32.totalorder %s20, 0
      %s233 = scalar_select %p232, %s20, 0
      %s234 = sadd.s32 %s233, %s231
      %s235 = smul.addr %s229, 36
      %s236 = sadd.s32 %s234, %s235
      %s237 = smul.addr %s236, 8
      %s238 = scalar_lea.vmem %s3, %s237
      %s239 = smul.u32 9, %s21
      %s240 = smul.u32 %s21, 72
      %v241 = vld [vmem:[%s226] sm:$0x1]
      %v243 = vlaneseq
      %v244 = vshrl.u32 %v243, 7
      %v245 = vsub.s32 0, %v244
      %v246 = vrot.slane %v241, %v245
      %s248 = scalar_lea.vmem %s219, %s240
      %v249 = vld [vmem:[%s248] sm:$0xff]
      %v250 = vld [vmem:[%s248 + $0x8] sm:$0xff]
      %v251 = vld [vmem:[%s248 + $0x10] sm:$0xff]
      %v252 = vld [vmem:[%s248 + $0x18] sm:$0xff]
      %v253 = vld [vmem:[%s248 + $0x20] sm:$0xff]
      %v254 = vld [vmem:[%s248 + $0x28] sm:$0xff]
      %v255 = vld [vmem:[%s248 + $0x30] sm:$0xff]
      %v256 = vld [vmem:[%s248 + $0x38] sm:$0xff]
      %v257 = vld [vmem:[%s248 + $0x40] sm:$0xff]
      %v258 = vld [vmem:[%s223] sm:$0xff]
      %v259 = vld [vmem:[%s223 + $0x8] sm:$0xf]
      %vm260 = vcmask 97280
      %v262 = vsel %vm260, %v249, 0
      %v265 = vsel %vm260, %v250, 0
      %v268 = vsel %vm260, %v251, 0
      %v271 = vsel %vm260, %v252, 0
      %v274 = vsel %vm260, %v253, 0
      %v277 = vsel %vm260, %v254, 0
      %v280 = vsel %vm260, %v255, 0
      %v283 = vsel %vm260, %v256, 0
      %v286 = vsel %vm260, %v257, 0
      %vm288 = vcmask 1043456
      %v290 = vsel %vm288, %v259, 0
      %292 = vmatprep.subr.mxu0 0.0
      %293 = vmatpush1.msra.mxu0 %v258
      %294 = vmatprep.subr.mxu0 0.0
      %295 = vmatpush1.msra.mxu0 %v290
      %296 = vmatprep.subr.mxu0 0.0
      %297 = vmatpush1.msra.mxu0 0.0
      %298 = vmatprep.subr.mxu0 0.0
      %299 = vmatpush1.msra.mxu0 0.0
      %300 = vmatprep.subr.mxu0 0.0
      %301 = vmatpush1.msra.mxu0 0.0
      %302 = vmatprep.subr.mxu0 0.0
      %303 = vmatpush1.msra.mxu0 0.0
      %304 = vmatprep.subr.mxu0 0.0
      %305 = vmatpush1.msra.mxu0 0.0
      %306 = vmatprep.subr.mxu0 0.0
      %307 = vmatpush1.msra.mxu0 0.0
      %308 = vmatprep.subr.mxu0 0.0
      %309 = vmatpush1.msra.mxu0 0.0
      %310 = vmatprep.subr.mxu0 0.0
      %311 = vmatpush1.msra.mxu0 0.0
      %312 = vmatprep.subr.mxu0 0.0
      %313 = vmatpush1.msra.mxu0 0.0
      %314 = vmatprep.subr.mxu0 0.0
      %315 = vmatpush1.msra.mxu0 0.0
      %316 = vmatprep.subr.mxu0 0.0
      %317 = vmatpush1.msra.mxu0 0.0
      %318 = vmatprep.subr.mxu0 0.0
      %319 = vmatpush1.msra.mxu0 0.0
      %320 = vmatprep.subr.mxu0 0.0
      %321 = vmatpush1.msra.mxu0 0.0
      %322 = vmatprep.subr.mxu0 0.0
      %323 = vmatpush1.msra.mxu0 0.0
      %324 = vmatprep.subr.mxu0 0.0
      %325 = vmatpush1.msra.mxu0 0.0
      %326 = vmatprep.subr.mxu0 0.0
      %327 = vmatpush1.msra.mxu0 0.0
      %328 = vmatprep.subr.mxu0 0.0
      %329 = vmatpush1.msra.mxu0 0.0
      %330 = vmatprep.subr.mxu0 0.0
      %331 = vmatpush1.msra.mxu0 0.0
      %332 = vmatprep.subr.mxu0 0.0
      %333 = vmatpush1.msra.mxu0 0.0
      %334 = vmatprep.subr.mxu0 0.0
      %335 = vmatpush1.msra.mxu0 0.0
      %336 = vmatprep.subr.mxu0 0.0
      %337 = vmatpush1.msra.mxu0 0.0
      %338 = vmatprep.subr.mxu0 0.0
      %339 = vmatpush1.msra.mxu0 0.0
      %340 = vmatprep.subr.mxu0 0.0
      %341 = vmatpush1.msra.mxu0 0.0
      %342 = vmatprep.subr.mxu0 0.0
      %343 = vmatpush1.msra.mxu0 0.0
      %344 = vmatprep.subr.mxu0 0.0
      %345 = vmatpush1.msra.mxu0 0.0
      %346 = vmatprep.subr.mxu0 0.0
      %347 = vmatpush1.msra.mxu0 0.0
      %348 = vmatprep.subr.mxu0 0.0
      %349 = vmatpush1.msra.mxu0 0.0
      %350 = vmatprep.subr.mxu0 0.0
      %351 = vmatpush1.msra.mxu0 0.0
      %352 = vmatprep.subr.mxu0 0.0
      %353 = vmatpush1.msra.mxu0 0.0
      %354 = vmatprep.subr.mxu0 0.0
      %355 = vmatpush1.msra.mxu0 0.0
      %356 = vmatprep.mubr.f32.mxu0 0.0
      %357 = vmatmul.mubr.f32.gmra.mrb[0].mxu0 %v262
      %v358 = vpop.f32.mrb[0].mxu0
      %v359 = vadd.f32 0.0, %v358
      %v360 = vpop.f32.mrb[0].mxu0
      %361 = vmatprep.mubr.f32.mxu0 0.0
      %362 = vmatmul.mubr.f32.gmra.mrb[0].mxu0 %v265
      %v363 = vpop.f32.mrb[0].mxu0
      %v364 = vadd.f32 0.0, %v363
      %v365 = vpop.f32.mrb[0].mxu0
      %366 = vmatprep.mubr.f32.mxu0 0.0
      %367 = vmatmul.mubr.f32.gmra.mrb[0].mxu0 %v268
      %v368 = vpop.f32.mrb[0].mxu0
      %v369 = vadd.f32 0.0, %v368
      %v370 = vpop.f32.mrb[0].mxu0
      %371 = vmatprep.mubr.f32.mxu0 0.0
      %372 = vmatmul.mubr.f32.gmra.mrb[0].mxu0 %v271
      %v373 = vpop.f32.mrb[0].mxu0
      %v374 = vadd.f32 0.0, %v373
      %v375 = vpop.f32.mrb[0].mxu0
      %376 = vmatprep.mubr.f32.mxu0 0.0
      %377 = vmatmul.mubr.f32.gmra.mrb[0].mxu0 %v274
      %v378 = vpop.f32.mrb[0].mxu0
      %v379 = vadd.f32 0.0, %v378
      %v380 = vpop.f32.mrb[0].mxu0
      %381 = vmatprep.mubr.f32.mxu0 0.0
      %382 = vmatmul.mubr.f32.gmra.mrb[0].mxu0 %v277
      %v383 = vpop.f32.mrb[0].mxu0
      %v384 = vadd.f32 0.0, %v383
      %v385 = vpop.f32.mrb[0].mxu0
      %386 = vmatprep.mubr.f32.mxu0 0.0
      %387 = vmatmul.mubr.f32.gmra.mrb[0].mxu0 %v280
      %v388 = vpop.f32.mrb[0].mxu0
      %v389 = vadd.f32 0.0, %v388
      %v390 = vpop.f32.mrb[0].mxu0
      %391 = vmatprep.mubr.f32.mxu0 0.0
      %392 = vmatmul.mubr.f32.gmra.mrb[0].mxu0 %v283
      %v393 = vpop.f32.mrb[0].mxu0
      %v394 = vadd.f32 0.0, %v393
      %v395 = vpop.f32.mrb[0].mxu0
      %396 = vmatprep.mubr.f32.mxu0 0.0
      %397 = vmatmul.mubr.f32.gmra.mrb[0].mxu0 %v286
      %v398 = vpop.f32.mrb[0].mxu0
      %v399 = vadd.f32 0.0, %v398
      %v400 = vpop.f32.mrb[0].mxu0
      %401 = vdwg.mxu0
      %v402 = vadd.f32 %v246, %v359
      %v403 = vadd.f32 %v246, %v364
      %v404 = vadd.f32 %v246, %v369
      %v405 = vadd.f32 %v246, %v374
      %v406 = vadd.f32 %v246, %v379
      %v407 = vadd.f32 %v246, %v384
      %v408 = vadd.f32 %v246, %v389
      %v409 = vadd.f32 %v246, %v394
      %v410 = vadd.f32 %v246, %v399
      %s411 = sadd.s32 %s240, 18
      %s412 = scalar_lea.vmem %s219, %s411
      %v413 = vld [vmem:[%s412] sm:$0xff]
      %v414 = vld [vmem:[%s412 + $0x8] sm:$0xff]
      %v415 = vld [vmem:[%s412 + $0x10] sm:$0xff]
      %v416 = vld [vmem:[%s412 + $0x18] sm:$0xff]
      %v417 = vld [vmem:[%s412 + $0x20] sm:$0xff]
      %v418 = vld [vmem:[%s412 + $0x28] sm:$0xff]
      %v419 = vld [vmem:[%s412 + $0x30] sm:$0xff]
      %v420 = vld [vmem:[%s412 + $0x38] sm:$0xff]
      %v421 = vld [vmem:[%s412 + $0x40] sm:$0xff]
      %s422 = scalar_lea.vmem %s223, 16
      %v423 = vld [vmem:[%s422] sm:$0xff]
      %v424 = vld [vmem:[%s422 + $0x8] sm:$0xf]
      %v426 = vsel %vm260, %v413, 0
      %v429 = vsel %vm260, %v414, 0
      %v432 = vsel %vm260, %v415, 0
      %v435 = vsel %vm260, %v416, 0
      %v438 = vsel %vm260, %v417, 0
      %v441 = vsel %vm260, %v418, 0
      %v444 = vsel %vm260, %v419, 0
      %v447 = vsel %vm260, %v420, 0
      %v450 = vsel %vm260, %v421, 0
      %v453 = vsel %vm288, %v424, 0
      %455 = vmatprep.subr.mxu0 0.0
      %456 = vmatpush1.msra.mxu0 %v423
      %457 = vmatprep.subr.mxu0 0.0
      %458 = vmatpush1.msra.mxu0 %v453
      %459 = vmatprep.subr.mxu0 0.0
      %460 = vmatpush1.msra.mxu0 0.0
      %461 = vmatprep.subr.mxu0 0.0
      %462 = vmatpush1.msra.mxu0 0.0
      %463 = vmatprep.subr.mxu0 0.0
      %464 = vmatpush1.msra.mxu0 0.0
      %465 = vmatprep.subr.mxu0 0.0
      %466 = vmatpush1.msra.mxu0 0.0
      %467 = vmatprep.subr.mxu0 0.0
      %468 = vmatpush1.msra.mxu0 0.0
      %469 = vmatprep.subr.mxu0 0.0
      %470 = vmatpush1.msra.mxu0 0.0
      %471 = vmatprep.subr.mxu0 0.0
      %472 = vmatpush1.msra.mxu0 0.0
      %473 = vmatprep.subr.mxu0 0.0
      %474 = vmatpush1.msra.mxu0 0.0
      %475 = vmatprep.subr.mxu0 0.0
      %476 = vmatpush1.msra.mxu0 0.0
      %477 = vmatprep.subr.mxu0 0.0
      %478 = vmatpush1.msra.mxu0 0.0
      %479 = vmatprep.subr.mxu0 0.0
      %480 = vmatpush1.msra.mxu0 0.0
      %481 = vmatprep.subr.mxu0 0.0
      %482 = vmatpush1.msra.mxu0 0.0
      %483 = vmatprep.subr.mxu0 0.0
      %484 = vmatpush1.msra.mxu0 0.0
      %485 = vmatprep.subr.mxu0 0.0
      %486 = vmatpush1.msra.mxu0 0.0
      %487 = vmatprep.subr.mxu0 0.0
      %488 = vmatpush1.msra.mxu0 0.0
      %489 = vmatprep.subr.mxu0 0.0
      %490 = vmatpush1.msra.mxu0 0.0
      %491 = vmatprep.subr.mxu0 0.0
      %492 = vmatpush1.msra.mxu0 0.0
      %493 = vmatprep.subr.mxu0 0.0
      %494 = vmatpush1.msra.mxu0 0.0
      %495 = vmatprep.subr.mxu0 0.0
      %496 = vmatpush1.msra.mxu0 0.0
      %497 = vmatprep.subr.mxu0 0.0
      %498 = vmatpush1.msra.mxu0 0.0
      %499 = vmatprep.subr.mxu0 0.0
      %500 = vmatpush1.msra.mxu0 0.0
      %501 = vmatprep.subr.mxu0 0.0
      %502 = vmatpush1.msra.mxu0 0.0
      %503 = vmatprep.subr.mxu0 0.0
      %504 = vmatpush1.msra.mxu0 0.0
      %505 = vmatprep.subr.mxu0 0.0
      %506 = vmatpush1.msra.mxu0 0.0
      %507 = vmatprep.subr.mxu0 0.0
      %508 = vmatpush1.msra.mxu0 0.0
      %509 = vmatprep.subr.mxu0 0.0
      %510 = vmatpush1.msra.mxu0 0.0
      %511 = vmatprep.subr.mxu0 0.0
      %512 = vmatpush1.msra.mxu0 0.0
      %513 = vmatprep.subr.mxu0 0.0
      %514 = vmatpush1.msra.mxu0 0.0
      %515 = vmatprep.subr.mxu0 0.0
      %516 = vmatpush1.msra.mxu0 0.0
      %517 = vmatprep.subr.mxu0 0.0
      %518 = vmatpush1.msra.mxu0 0.0
      %519 = vmatprep.mubr.f32.mxu0 0.0
      %520 = vmatmul.mubr.f32.gmra.mrb[0].mxu0 %v426
      %v521 = vpop.f32.mrb[0].mxu0
      %v522 = vadd.f32 0.0, %v521
      %v523 = vpop.f32.mrb[0].mxu0
      %524 = vmatprep.mubr.f32.mxu0 0.0
      %525 = vmatmul.mubr.f32.gmra.mrb[0].mxu0 %v429
      %v526 = vpop.f32.mrb[0].mxu0
      %v527 = vadd.f32 0.0, %v526
      %v528 = vpop.f32.mrb[0].mxu0
      %529 = vmatprep.mubr.f32.mxu0 0.0
      %530 = vmatmul.mubr.f32.gmra.mrb[0].mxu0 %v432
      %v531 = vpop.f32.mrb[0].mxu0
      %v532 = vadd.f32 0.0, %v531
      %v533 = vpop.f32.mrb[0].mxu0
      %534 = vmatprep.mubr.f32.mxu0 0.0
      %535 = vmatmul.mubr.f32.gmra.mrb[0].mxu0 %v435
      %v536 = vpop.f32.mrb[0].mxu0
      %v537 = vadd.f32 0.0, %v536
      %v538 = vpop.f32.mrb[0].mxu0
      %539 = vmatprep.mubr.f32.mxu0 0.0
      %540 = vmatmul.mubr.f32.gmra.mrb[0].mxu0 %v438
      %v541 = vpop.f32.mrb[0].mxu0
      %v542 = vadd.f32 0.0, %v541
      %v543 = vpop.f32.mrb[0].mxu0
      %544 = vmatprep.mubr.f32.mxu0 0.0
      %545 = vmatmul.mubr.f32.gmra.mrb[0].mxu0 %v441
      %v546 = vpop.f32.mrb[0].mxu0
      %v547 = vadd.f32 0.0, %v546
      %v548 = vpop.f32.mrb[0].mxu0
      %549 = vmatprep.mubr.f32.mxu0 0.0
      %550 = vmatmul.mubr.f32.gmra.mrb[0].mxu0 %v444
      %v551 = vpop.f32.mrb[0].mxu0
      %v552 = vadd.f32 0.0, %v551
      %v553 = vpop.f32.mrb[0].mxu0
      %554 = vmatprep.mubr.f32.mxu0 0.0
      %555 = vmatmul.mubr.f32.gmra.mrb[0].mxu0 %v447
      %v556 = vpop.f32.mrb[0].mxu0
      %v557 = vadd.f32 0.0, %v556
      %v558 = vpop.f32.mrb[0].mxu0
      %559 = vmatprep.mubr.f32.mxu0 0.0
      %560 = vmatmul.mubr.f32.gmra.mrb[0].mxu0 %v450
      %v561 = vpop.f32.mrb[0].mxu0
      %v562 = vadd.f32 0.0, %v561
      %v563 = vpop.f32.mrb[0].mxu0
      %564 = vdwg.mxu0
      %v565 = vadd.f32 %v402, %v522
      %v566 = vadd.f32 %v403, %v527
      %v567 = vadd.f32 %v404, %v532
      %v568 = vadd.f32 %v405, %v537
      %v569 = vadd.f32 %v406, %v542
      %v570 = vadd.f32 %v407, %v547
      %v571 = vadd.f32 %v408, %v552
      %v572 = vadd.f32 %v409, %v557
      %v573 = vadd.f32 %v410, %v562
      %s574 = sadd.s32 %s240, 36
      %s575 = scalar_lea.vmem %s219, %s574
      %v576 = vld [vmem:[%s575] sm:$0xff]
      %v577 = vld [vmem:[%s575 + $0x8] sm:$0xff]
      %v578 = vld [vmem:[%s575 + $0x10] sm:$0xff]
      %v579 = vld [vmem:[%s575 + $0x18] sm:$0xff]
      %v580 = vld [vmem:[%s575 + $0x20] sm:$0xff]
      %v581 = vld [vmem:[%s575 + $0x28] sm:$0xff]
      %v582 = vld [vmem:[%s575 + $0x30] sm:$0xff]
      %v583 = vld [vmem:[%s575 + $0x38] sm:$0xff]
      %v584 = vld [vmem:[%s575 + $0x40] sm:$0xff]
      %s585 = scalar_lea.vmem %s223, 32
      %v586 = vld [vmem:[%s585] sm:$0xff]
      %v587 = vld [vmem:[%s585 + $0x8] sm:$0xf]
      %v589 = vsel %vm260, %v576, 0
      %v592 = vsel %vm260, %v577, 0
      %v595 = vsel %vm260, %v578, 0
      %v598 = vsel %vm260, %v579, 0
      %v601 = vsel %vm260, %v580, 0
      %v604 = vsel %vm260, %v581, 0
      %v607 = vsel %vm260, %v582, 0
      %v610 = vsel %vm260, %v583, 0
      %v613 = vsel %vm260, %v584, 0
      %v616 = vsel %vm288, %v587, 0
      %618 = vmatprep.subr.mxu0 0.0
      %619 = vmatpush1.msra.mxu0 %v586
      %620 = vmatprep.subr.mxu0 0.0
      %621 = vmatpush1.msra.mxu0 %v616
      %622 = vmatprep.subr.mxu0 0.0
      %623 = vmatpush1.msra.mxu0 0.0
      %624 = vmatprep.subr.mxu0 0.0
      %625 = vmatpush1.msra.mxu0 0.0
      %626 = vmatprep.subr.mxu0 0.0
      %627 = vmatpush1.msra.mxu0 0.0
      %628 = vmatprep.subr.mxu0 0.0
      %629 = vmatpush1.msra.mxu0 0.0
      %630 = vmatprep.subr.mxu0 0.0
      %631 = vmatpush1.msra.mxu0 0.0
      %632 = vmatprep.subr.mxu0 0.0
      %633 = vmatpush1.msra.mxu0 0.0
      %634 = vmatprep.subr.mxu0 0.0
      %635 = vmatpush1.msra.mxu0 0.0
      %636 = vmatprep.subr.mxu0 0.0
      %637 = vmatpush1.msra.mxu0 0.0
      %638 = vmatprep.subr.mxu0 0.0
      %639 = vmatpush1.msra.mxu0 0.0
      %640 = vmatprep.subr.mxu0 0.0
      %641 = vmatpush1.msra.mxu0 0.0
      %642 = vmatprep.subr.mxu0 0.0
      %643 = vmatpush1.msra.mxu0 0.0
      %644 = vmatprep.subr.mxu0 0.0
      %645 = vmatpush1.msra.mxu0 0.0
      %646 = vmatprep.subr.mxu0 0.0
      %647 = vmatpush1.msra.mxu0 0.0
      %648 = vmatprep.subr.mxu0 0.0
      %649 = vmatpush1.msra.mxu0 0.0
      %650 = vmatprep.subr.mxu0 0.0
      %651 = vmatpush1.msra.mxu0 0.0
      %652 = vmatprep.subr.mxu0 0.0
      %653 = vmatpush1.msra.mxu0 0.0
      %654 = vmatprep.subr.mxu0 0.0
      %655 = vmatpush1.msra.mxu0 0.0
      %656 = vmatprep.subr.mxu0 0.0
      %657 = vmatpush1.msra.mxu0 0.0
      %658 = vmatprep.subr.mxu0 0.0
      %659 = vmatpush1.msra.mxu0 0.0
      %660 = vmatprep.subr.mxu0 0.0
      %661 = vmatpush1.msra.mxu0 0.0
      %662 = vmatprep.subr.mxu0 0.0
      %663 = vmatpush1.msra.mxu0 0.0
      %664 = vmatprep.subr.mxu0 0.0
      %665 = vmatpush1.msra.mxu0 0.0
      %666 = vmatprep.subr.mxu0 0.0
      %667 = vmatpush1.msra.mxu0 0.0
      %668 = vmatprep.subr.mxu0 0.0
      %669 = vmatpush1.msra.mxu0 0.0
      %670 = vmatprep.subr.mxu0 0.0
      %671 = vmatpush1.msra.mxu0 0.0
      %672 = vmatprep.subr.mxu0 0.0
      %673 = vmatpush1.msra.mxu0 0.0
      %674 = vmatprep.subr.mxu0 0.0
      %675 = vmatpush1.msra.mxu0 0.0
      %676 = vmatprep.subr.mxu0 0.0
      %677 = vmatpush1.msra.mxu0 0.0
      %678 = vmatprep.subr.mxu0 0.0
      %679 = vmatpush1.msra.mxu0 0.0
      %680 = vmatprep.subr.mxu0 0.0
      %681 = vmatpush1.msra.mxu0 0.0
      %682 = vmatprep.mubr.f32.mxu0 0.0
      %683 = vmatmul.mubr.f32.gmra.mrb[0].mxu0 %v589
      %v684 = vpop.f32.mrb[0].mxu0
      %v685 = vadd.f32 0.0, %v684
      %v686 = vpop.f32.mrb[0].mxu0
      %687 = vmatprep.mubr.f32.mxu0 0.0
      %688 = vmatmul.mubr.f32.gmra.mrb[0].mxu0 %v592
      %v689 = vpop.f32.mrb[0].mxu0
      %v690 = vadd.f32 0.0, %v689
      %v691 = vpop.f32.mrb[0].mxu0
      %692 = vmatprep.mubr.f32.mxu0 0.0
      %693 = vmatmul.mubr.f32.gmra.mrb[0].mxu0 %v595
      %v694 = vpop.f32.mrb[0].mxu0
      %v695 = vadd.f32 0.0, %v694
      %v696 = vpop.f32.mrb[0].mxu0
      %697 = vmatprep.mubr.f32.mxu0 0.0
      %698 = vmatmul.mubr.f32.gmra.mrb[0].mxu0 %v598
      %v699 = vpop.f32.mrb[0].mxu0
      %v700 = vadd.f32 0.0, %v699
      %v701 = vpop.f32.mrb[0].mxu0
      %702 = vmatprep.mubr.f32.mxu0 0.0
      %703 = vmatmul.mubr.f32.gmra.mrb[0].mxu0 %v601
      %v704 = vpop.f32.mrb[0].mxu0
      %v705 = vadd.f32 0.0, %v704
      %v706 = vpop.f32.mrb[0].mxu0
      %707 = vmatprep.mubr.f32.mxu0 0.0
      %708 = vmatmul.mubr.f32.gmra.mrb[0].mxu0 %v604
      %v709 = vpop.f32.mrb[0].mxu0
      %v710 = vadd.f32 0.0, %v709
      %v711 = vpop.f32.mrb[0].mxu0
      %712 = vmatprep.mubr.f32.mxu0 0.0
      %713 = vmatmul.mubr.f32.gmra.mrb[0].mxu0 %v607
      %v714 = vpop.f32.mrb[0].mxu0
      %v715 = vadd.f32 0.0, %v714
      %v716 = vpop.f32.mrb[0].mxu0
      %717 = vmatprep.mubr.f32.mxu0 0.0
      %718 = vmatmul.mubr.f32.gmra.mrb[0].mxu0 %v610
      %v719 = vpop.f32.mrb[0].mxu0
      %v720 = vadd.f32 0.0, %v719
      %v721 = vpop.f32.mrb[0].mxu0
      %722 = vmatprep.mubr.f32.mxu0 0.0
      %723 = vmatmul.mubr.f32.gmra.mrb[0].mxu0 %v613
      %v724 = vpop.f32.mrb[0].mxu0
      %v725 = vadd.f32 0.0, %v724
      %v726 = vpop.f32.mrb[0].mxu0
      %727 = vdwg.mxu0
      %v728 = vadd.f32 %v565, %v685
      %v729 = vadd.f32 %v566, %v690
      %v730 = vadd.f32 %v567, %v695
      %v731 = vadd.f32 %v568, %v700
      %v732 = vadd.f32 %v569, %v705
      %v733 = vadd.f32 %v570, %v710
      %v734 = vadd.f32 %v571, %v715
      %v735 = vadd.f32 %v572, %v720
      %v736 = vadd.f32 %v573, %v725
      %737 = vst [vmem:[%s238] sm:$0xff] %v728
      %738 = vst [vmem:[%s238 + $0x8] sm:$0xff] %v729
      %739 = vst [vmem:[%s238 + $0x10] sm:$0xff] %v730
      %740 = vst [vmem:[%s238 + $0x18] sm:$0xff] %v731
      %741 = vst [vmem:[%s238 + $0x20] sm:$0xff] %v732
      %742 = vst [vmem:[%s238 + $0x28] sm:$0xff] %v733
      %743 = vst [vmem:[%s238 + $0x30] sm:$0xff] %v734
      %744 = vst [vmem:[%s238 + $0x38] sm:$0xff] %v735
      %745 = vst [vmem:[%s238 + $0x40] sm:$0xff] %v736
      %s746 = smul.u32 9, %s21
      %p747 = scmp.lt.s32.totalorder %s19, 1
      %s748 = scalar_select %p747, %s19, 1
      %p749 = scmp.lt.s32.totalorder %s746, 35
      %s750 = scalar_select %p749, %s746, 35
      %p751 = scmp.lt.s32.totalorder %s20, 0
      %s752 = scalar_select %p751, %s20, 0
      %s753 = sadd.s32 %s752, %s750
      %s754 = smul.addr %s748, 36
      %s755 = sadd.s32 %s753, %s754
      %s756 = smul.addr %s755, 8
      %s757 = scalar_lea.vmem %s3, %s756
      // Predicated region
      $region33: #{my_convo2d.1} parent=31 // pred_check
        %p758 = pneg %p133
      $region34: #{my_convo2d.1} parent=31 // pred_check_branch
        %760 = sbr.rel (%p758) target = $region36
      $region35: #{my_convo2d.1} parent=31 // pred_region
        %s761 = smul.u32 9, %s21
      $region36: #{my_convo2d.1} parent=31 // pred_fallthru
        _
    $region32: #{my_convo2d.1} parent=5 // pred_fallthru
      _
    %p762 = scmp.le.s32.totalorder 2, %s9
    // Predicated region
    $region37: #{my_convo2d.1} parent=5 // pred_check
      %p763 = pneg %p762
    $region38: #{my_convo2d.1} parent=5 // pred_check_branch
      %765 = sbr.rel (%p763) target = $region40
    $region39: #{my_convo2d.1} parent=5 // pred_region
      %s766 = ssub.s32 %s9, 2
      // Predicated region
      $region41: #{my_convo2d.1} parent=39 // pred_check
        %p767 = pneg %p139
      $region42: #{my_convo2d.1} parent=39 // pred_check_branch
        %769 = sbr.rel (%p767) target = $region44
      $region43: #{my_convo2d.1} parent=39 // pred_region
        %s770 = smul.u32 9, %s24
        %p771 = scmp.lt.s32.totalorder %s22, 1
        %s772 = scalar_select %p771, %s22, 1
        %p773 = scmp.lt.s32.totalorder %s770, 35
        %s774 = scalar_select %p773, %s770, 35
        %p775 = scmp.lt.s32.totalorder %s23, 0
        %s776 = scalar_select %p775, %s23, 0
        %s777 = sadd.s32 %s776, %s774
        %s778 = smul.addr %s772, 36
        %s779 = sadd.s32 %s777, %s778
        %s780 = smul.addr %s779, 8
        %s781 = scalar_lea.vmem %s3, %s780
      $region44: #{my_convo2d.1} parent=39 // pred_fallthru
        _
    $region40: #{my_convo2d.1} parent=5 // pred_fallthru
      _
  $region6: #{my_convo2d.1} parent=0 // loop_footer
    %s13 = sadd.s32 1, %s9
  $region7: #{my_convo2d.1} parent=0 // loop_footer_branch
    %8 = sbr.rel target = $region3
  $region8: #{my_convo2d.1} parent=0 // loop_exit
    _

</llo_original>
